<compile_context>
chip_gen: v7x
topology: tpu7x:2x2x1
jax: 0.10.0
libtpu: 0.0.40
codegen_flags: <defaults>
</compile_context>

<pallas_src>
import functools
import math

import jax
import jax.numpy as jnp
from jax.experimental import pallas as pl
from jax.experimental.pallas import tpu as pltpu


def _round_up(a: int, b: int) -> int:
    return ((a + b - 1) // b) * b


def _cdiv(a: int, b: int) -> int:
    return -(-a // b)


# --------------------------------------------------------------------------
# Kernel
# --------------------------------------------------------------------------
def _simple_embedding_kernel(x_ref, t0_ref, t1_ref, t2_ref, o_ref, *,
                             num_buckets, v_pad, groups):
    # x_ref:   (TM, G)        int32  raw ids, G tokens packed per output row
    # t*_ref:  (G*Vpad, G*D)  bf16   block-diagonal table planes (f32 = t0+t1+t2)
    # o_ref:   (TM, G*D)      f32    G embeddings concatenated per row
    idx = x_ref[...]                                          # (TM, G)
    # mask / mod fused: h in [0, num_buckets], 0 for padding ids.
    h = jnp.where(idx == 0, 0, idx % num_buckets + 1)         # (TM, G) int32

    tm = idx.shape[0]
    k = groups * v_pad
    # Lane index within the packed K axis (regenerated per step; see header).
    lane = jax.lax.broadcasted_iota(jnp.int32, (tm, k), 1)    # (TM, K)

    # Target lane for group j is j * Vpad + h[:, j].
    offs = jax.lax.broadcasted_iota(jnp.int32, (1, groups), 1) * v_pad
    target = h + offs                                         # (TM, G)

    # One-hot with G ones per packed row; compare/OR in bool (v5e-friendly),
    # single cast to bf16 (exact 0/1) so the MXU operand is half-width.
    hit = None
    for j in range(groups):
        m = lane == target[:, j:j + 1]
        hit = m if hit is None else jnp.logical_or(hit, m)
    onehot = hit.astype(jnp.bfloat16)                         # (TM, K) bf16

    # Block-diagonal planes => each D-wide block of an output row picks up
    # exactly one table row per plane; f32 accumulation keeps it bit-exact.
    acc = jnp.dot(onehot, t0_ref[...], preferred_element_type=jnp.float32)
    acc = acc + jnp.dot(onehot, t1_ref[...], preferred_element_type=jnp.float32)
    acc = acc + jnp.dot(onehot, t2_ref[...], preferred_element_type=jnp.float32)
    o_ref[...] = acc.astype(o_ref.dtype)


# --------------------------------------------------------------------------
# Wrapper
# --------------------------------------------------------------------------
def _plan_packing(v: int, d: int):
    # Pack G tokens per 128-lane output row so every store is lane-dense.
    # If D does not divide 128 this falls back to G=1 (masked stores): still
    # correct, but a documented perf cliff.
    if d < 128 and 128 % d == 0:
        g = 128 // d
    else:
        g = 1
    v_pad = _round_up(v, max(128 // g, 8))
    return g, v_pad


def _pack_table_planes(table, g: int, v_pad: int):
    """Exact 3-way bf16 split of the f32 table, replicated block-diagonally.

    Call ONCE at init.  table[h] == (p0 + p1 + p2)[h] bit-exactly for
    normal-range f32 weights (each residual subtraction is exact in f32 and
    leaves <= 8 significant bits for the last plane).
    """
    v, d = table.shape
    t32 = jnp.zeros((v_pad, d), jnp.float32).at[:v].set(table.astype(jnp.float32))
    p0 = t32.astype(jnp.bfloat16)
    r1 = t32 - p0.astype(jnp.float32)
    p1 = r1.astype(jnp.bfloat16)
    r2 = r1 - p1.astype(jnp.float32)
    p2 = r2.astype(jnp.bfloat16)

    planes = []
    for p in (p0, p1, p2):
        bd = jnp.zeros((g * v_pad, g * d), jnp.bfloat16)
        for j in range(g):
            bd = bd.at[j * v_pad:(j + 1) * v_pad, j * d:(j + 1) * d].set(p)
        planes.append(bd)
    return tuple(planes)


def _lookup(x, planes, *, num_buckets, d, g, v_pad, tile_tokens, out_dtype):
    batch_shape = x.shape
    n = math.prod(batch_shape)
    lanes = g * d
    k = g * v_pad

    # ---- static tile planning ----
    m = _cdiv(n, g)                                       # packed rows needed
    tm = min(max(8, _round_up(tile_tokens // g, 8)),      # cap by tile_tokens
             max(8, _round_up(_cdiv(m, 2), 8)))           # but keep >= 2 steps
    grid = _cdiv(m, tm)
    if 1 < grid < 8 and grid % 2:                         # small odd grid: keep
        tm = max(8, _round_up(_cdiv(m, grid + 1), 8))     # v7x's 2 TCs balanced
        grid = _cdiv(m, tm)
    m_total = grid * tm

    # ---- pack ids: token t sits at (t // G, t % G); padding ids are 0 ----
    x_flat = x.reshape(-1).astype(jnp.int32)
    pad = m_total * g - n
    if pad:
        x_flat = jnp.concatenate([x_flat, jnp.zeros((pad,), jnp.int32)])
    x_packed = x_flat.reshape(m_total, g)

    kernel = functools.partial(_simple_embedding_kernel,
                               num_buckets=num_buckets, v_pad=v_pad, groups=g)

    out = pl.pallas_call(
        kernel,
        out_shape=jax.ShapeDtypeStruct((m_total, lanes), jnp.float32),
        grid_spec=pltpu.PrefetchScalarGridSpec(
            num_scalar_prefetch=0,
            grid=(grid,),
            in_specs=[pl.BlockSpec((tm, g), lambda i: (i, 0))]            # ids
                     + [pl.BlockSpec((k, lanes), lambda i: (0, 0))] * 3,  # planes
            out_specs=pl.BlockSpec((tm, lanes), lambda i: (i, 0)),
        ),
        compiler_params=pltpu.CompilerParams(
            dimension_semantics=("parallel",),
        ),
    )(x_packed, *planes)

    # (M, G*D) row-major == (M*G, D): un-pack; slice only if padding exists.
    flat = out.reshape(m_total * g, d)
    if pad:
        flat = flat[:n]
    return flat.reshape(*batch_shape, d).astype(out_dtype)


def build_simple_embedding(table, *, tile_tokens=8192):
    """Pack the table planes once (init time) and return a jitted lookup(x)."""
    v, d = table.shape
    num_buckets = v - 1
    g, v_pad = _plan_packing(v, d)
    planes = _pack_table_planes(table, g, v_pad)      # computed once, eagerly

    @jax.jit
    def lookup(x):
        return _lookup(x, planes, num_buckets=num_buckets, d=d, g=g,
                       v_pad=v_pad, tile_tokens=tile_tokens,
                       out_dtype=table.dtype)

    return lookup


def simple_embedding(x, table, *, tile_tokens=8192):
    """One-shot convenience (re-packs the table every call; prefer
    build_simple_embedding in production)."""
    return build_simple_embedding(table, tile_tokens=tile_tokens)(x)


def _reference(x, table):
    num_buckets = table.shape[0] - 1
    mask = (x != 0).astype(x.dtype)
    h = (x % num_buckets + 1) * mask
    return table[h]


# --------------------------------------------------------------------------
if __name__ == "__main__":
    num_buckets = 50
    embedding_dim = 32

    key = jax.random.PRNGKey(0)
    k_tab, k_x1, k_x2 = jax.random.split(key, 3)

    # nn.Embedding default init ~ N(0, 1); deterministic synthetic weights.
    table = jax.random.normal(
        k_tab, (num_buckets + 1, embedding_dim), dtype=jnp.float32
    )

    lookup = build_simple_embedding(table, tile_tokens=8192)  # pack planes once

    # Small shape: m = 32 packed rows -> 2 grid steps of 16; ids include zeros.
    x_small = jax.random.randint(k_x1, (4, 32), 0, 200, dtype=jnp.int32)
    out_small = jax.block_until_ready(lookup(x_small))
    ref_small = _reference(x_small, table)
    assert out_small.shape == (4, 32, embedding_dim)
    assert jnp.allclose(out_small, ref_small, atol=1e-6, rtol=1e-6), "small mismatch"

    # Larger shape: zero padding, full tiles, 2-step parallel grid (TM = 1024).
    x_big = jax.random.randint(k_x2, (2, 4096), 0, 10_000, dtype=jnp.int32)
    out_big = jax.block_until_ready(lookup(x_big))
    ref_big = _reference(x_big, table)
    assert out_big.shape == (2, 4096, embedding_dim)
    assert jnp.allclose(out_big, ref_big, atol=1e-6, rtol=1e-6), "big mismatch"

    print("KERNEL_OK")
</pallas_src>

<mosaic_0001>
module attributes {stable_mosaic.version = 11 : i64} {
  func.func @_simple_embedding_kernel(%arg0: i32, %arg1: memref<16x4xi32, #tpu.memory_space<vmem>>, %arg2: memref<256x128xbf16, #tpu.memory_space<vmem>>, %arg3: memref<256x128xbf16, #tpu.memory_space<vmem>>, %arg4: memref<256x128xbf16, #tpu.memory_space<vmem>>, %arg5: memref<16x128xf32, #tpu.memory_space<vmem>>) attributes {dimension_semantics = [#tpu.dimension_semantics<parallel>], iteration_bounds = array<i64: 2>, scalar_prefetch = 0 : i64, scratch_operands = 0 : i64, tpu.core_type = #tpu.core_type<tc>, window_params = [{transform_indices = @transform_0, window_bounds = array<i64: 16, 4>}, {pipeline_mode = #tpu.pipeline_mode<synchronous>, transform_indices = @transform_1, window_bounds = array<i64: 256, 128>}, {pipeline_mode = #tpu.pipeline_mode<synchronous>, transform_indices = @transform_2, window_bounds = array<i64: 256, 128>}, {pipeline_mode = #tpu.pipeline_mode<synchronous>, transform_indices = @transform_3, window_bounds = array<i64: 256, 128>}, {transform_indices = @transform_4, window_bounds = array<i64: 16, 128>}]} {
    %c0 = arith.constant 0 : index
    %c0_0 = arith.constant 0 : index
    %0 = vector.load %arg1[%c0, %c0_0] : memref<16x4xi32, #tpu.memory_space<vmem>>, vector<16x4xi32>
    %c0_i32 = arith.constant 0 : i32
    %1 = vector.broadcast %c0_i32 : i32 to vector<16x4xi32>
    %2 = arith.cmpi eq, %0, %1 : vector<16x4xi32>
    %c50_i32 = arith.constant 50 : i32
    %c0_i32_1 = arith.constant 0 : i32
    %3 = arith.cmpi eq, %c50_i32, %c0_i32_1 : i32
    %c1_i32 = arith.constant 1 : i32
    %4 = arith.select %3, %c1_i32, %c50_i32 : i32
    %5 = vector.broadcast %4 : i32 to vector<16x4xi32>
    %6 = arith.remsi %0, %5 : vector<16x4xi32>
    %c0_i32_2 = arith.constant 0 : i32
    %7 = vector.broadcast %c0_i32_2 : i32 to vector<16x4xi32>
    %8 = arith.cmpi ne, %6, %7 : vector<16x4xi32>
    %c0_i32_3 = arith.constant 0 : i32
    %9 = vector.broadcast %c0_i32_3 : i32 to vector<16x4xi32>
    %10 = arith.cmpi slt, %6, %9 : vector<16x4xi32>
    %c0_i32_4 = arith.constant 0 : i32
    %11 = arith.cmpi slt, %4, %c0_i32_4 : i32
    %12 = vector.broadcast %11 : i1 to vector<16x4xi1>
    %13 = vector.broadcast %12 : vector<16x4xi1> to vector<16x4xi1>
    %14 = arith.xori %10, %13 : vector<16x4xi1>
    %15 = arith.andi %14, %8 : vector<16x4xi1>
    %16 = vector.broadcast %4 : i32 to vector<16x4xi32>
    %17 = arith.addi %6, %16 : vector<16x4xi32>
    %18 = arith.select %15, %17, %6 : vector<16x4xi1>, vector<16x4xi32>
    %c1_i32_5 = arith.constant 1 : i32
    %19 = vector.broadcast %c1_i32_5 : i32 to vector<16x4xi32>
    %20 = arith.addi %18, %19 : vector<16x4xi32>
    %c0_i32_6 = arith.constant 0 : i32
    %21 = vector.broadcast %c0_i32_6 : i32 to vector<16x4xi32>
    %22 = arith.select %2, %21, %20 : vector<16x4xi1>, vector<16x4xi32>
    %23 = tpu.iota {dimensions = array<i32: 1>} : vector<16x256xi32>
    %24 = tpu.iota {dimensions = array<i32: 1>} : vector<1x4xi32>
    %c64_i32 = arith.constant 64 : i32
    %25 = vector.broadcast %c64_i32 : i32 to vector<1x4xi32>
    %26 = arith.muli %24, %25 : vector<1x4xi32>
    %27 = vector.broadcast %26 : vector<1x4xi32> to vector<16x4xi32>
    %28 = arith.addi %22, %27 : vector<16x4xi32>
    %29 = vector.extract_strided_slice %28 {offsets = [0, 0], sizes = [16, 1], strides = [1, 1]} : vector<16x4xi32> to vector<16x1xi32>
    %30 = vector.broadcast %29 : vector<16x1xi32> to vector<16x256xi32>
    %31 = arith.cmpi eq, %23, %30 : vector<16x256xi32>
    %32 = vector.extract_strided_slice %28 {offsets = [0, 1], sizes = [16, 1], strides = [1, 1]} : vector<16x4xi32> to vector<16x1xi32>
    %33 = vector.broadcast %32 : vector<16x1xi32> to vector<16x256xi32>
    %34 = arith.cmpi eq, %23, %33 : vector<16x256xi32>
    %35 = arith.ori %31, %34 : vector<16x256xi1>
    %36 = vector.extract_strided_slice %28 {offsets = [0, 2], sizes = [16, 1], strides = [1, 1]} : vector<16x4xi32> to vector<16x1xi32>
    %37 = vector.broadcast %36 : vector<16x1xi32> to vector<16x256xi32>
    %38 = arith.cmpi eq, %23, %37 : vector<16x256xi32>
    %39 = arith.ori %35, %38 : vector<16x256xi1>
    %40 = vector.extract_strided_slice %28 {offsets = [0, 3], sizes = [16, 1], strides = [1, 1]} : vector<16x4xi32> to vector<16x1xi32>
    %41 = vector.broadcast %40 : vector<16x1xi32> to vector<16x256xi32>
    %42 = arith.cmpi eq, %23, %41 : vector<16x256xi32>
    %43 = arith.ori %39, %42 : vector<16x256xi1>
    %44 = arith.extui %43 : vector<16x256xi1> to vector<16x256xi32>
    %45 = arith.sitofp %44 : vector<16x256xi32> to vector<16x256xf32>
    %46 = arith.truncf %45 : vector<16x256xf32> to vector<16x256xbf16>
    %c0_7 = arith.constant 0 : index
    %c0_8 = arith.constant 0 : index
    %47 = vector.load %arg2[%c0_7, %c0_8] : memref<256x128xbf16, #tpu.memory_space<vmem>>, vector<256x128xbf16>
    %cst = arith.constant dense<0.000000e+00> : vector<16x128xf32>
    %48 = tpu.matmul %46, %47, %cst {dimension_numbers = #tpu.dot_dimension_numbers<[1], [0], [0], [1], [0, 0, 1, 1], [], []>} : vector<16x256xbf16>, vector<256x128xbf16>, vector<16x128xf32> -> vector<16x128xf32>
    %c0_9 = arith.constant 0 : index
    %c0_10 = arith.constant 0 : index
    %49 = vector.load %arg3[%c0_9, %c0_10] : memref<256x128xbf16, #tpu.memory_space<vmem>>, vector<256x128xbf16>
    %cst_11 = arith.constant dense<0.000000e+00> : vector<16x128xf32>
    %50 = tpu.matmul %46, %49, %cst_11 {dimension_numbers = #tpu.dot_dimension_numbers<[1], [0], [0], [1], [0, 0, 1, 1], [], []>} : vector<16x256xbf16>, vector<256x128xbf16>, vector<16x128xf32> -> vector<16x128xf32>
    %51 = arith.addf %48, %50 : vector<16x128xf32>
    %c0_12 = arith.constant 0 : index
    %c0_13 = arith.constant 0 : index
    %52 = vector.load %arg4[%c0_12, %c0_13] : memref<256x128xbf16, #tpu.memory_space<vmem>>, vector<256x128xbf16>
    %cst_14 = arith.constant dense<0.000000e+00> : vector<16x128xf32>
    %53 = tpu.matmul %46, %52, %cst_14 {dimension_numbers = #tpu.dot_dimension_numbers<[1], [0], [0], [1], [0, 0, 1, 1], [], []>} : vector<16x256xbf16>, vector<256x128xbf16>, vector<16x128xf32> -> vector<16x128xf32>
    %54 = arith.addf %51, %53 : vector<16x128xf32>
    %c0_15 = arith.constant 0 : index
    %c0_16 = arith.constant 0 : index
    %55 = vector.load %arg5[%c0_15, %c0_16] : memref<16x128xf32, #tpu.memory_space<vmem>>, vector<16x128xf32>
    tpu.vector_store %arg5[%c0_15, %c0_16], %54 {strides = array<i32>} : memref<16x128xf32, #tpu.memory_space<vmem>>, vector<16x128xf32>,
    return
  }
  func.func @transform_0(%arg0: i32) -> (i32, i32) {
    %c0_i32 = arith.constant 0 : i32
    %c0_i32_0 = arith.constant 0 : i32
    return %arg0, %c0_i32 : i32, i32
  }
  func.func @transform_1(%arg0: i32) -> (i32, i32) {
    %c0_i32 = arith.constant 0 : i32
    %c0_i32_0 = arith.constant 0 : i32
    %c0_i32_1 = arith.constant 0 : i32
    return %c0_i32, %c0_i32_0 : i32, i32
  }
  func.func @transform_2(%arg0: i32) -> (i32, i32) {
    %c0_i32 = arith.constant 0 : i32
    %c0_i32_0 = arith.constant 0 : i32
    %c0_i32_1 = arith.constant 0 : i32
    return %c0_i32, %c0_i32_0 : i32, i32
  }
  func.func @transform_3(%arg0: i32) -> (i32, i32) {
    %c0_i32 = arith.constant 0 : i32
    %c0_i32_0 = arith.constant 0 : i32
    %c0_i32_1 = arith.constant 0 : i32
    return %c0_i32, %c0_i32_0 : i32, i32
  }
  func.func @transform_4(%arg0: i32) -> (i32, i32) {
    %c0_i32 = arith.constant 0 : i32
    %c0_i32_0 = arith.constant 0 : i32
    return %arg0, %c0_i32 : i32, i32
  }
}

</mosaic_0001>

<llo_original>
// kernel: lookup.1
$region0: #{lookup.1}
  #allocation0 [shape = 'u32[]', space=smem, size = 0x4, offset = 0x4, fixed_abs, tag = 'smem constant byte address 0x4 - core index']
  #allocation1 [shape = 'u32[144,128]{1,0:T(1,128)}', space=vmem, size = 0x12000, scoped, tag = 'internal scratch']
  %s0 = inlined_call_operand.vmem [shape: s32[32,4], index: 0, kind: input, shape index: {}]
  %s1 = inlined_call_operand.hbm [shape: bf16[256,128], index: 1, kind: input, shape index: {}]
  %s2 = inlined_call_operand.hbm [shape: bf16[256,128], index: 2, kind: input, shape index: {}]
  %s3 = inlined_call_operand.hbm [shape: bf16[256,128], index: 3, kind: input, shape index: {}]
  %s4 = inlined_call_operand.vmem [shape: f32[32,128], index: 4, kind: output, shape index: {}]
  %s5 = sld [smem:[#allocation0]]
  $region61: #{lookup.1} parent=0
    _
  %s7 = ssub.s32 1, %s5
  %s8 = scalar_select 0, %s7, %s5
  $region1: #{lookup.1} parent=0
    #allocation2 [shape = 'u8[65536]{0}', space=vmem, size = 0x10000, scoped, tag = 'input window, operand 1, single buffered']
    #allocation3 [shape = 's32[2]{0}', space=sflag, size = 0x8, scoped, tag = 'scoped memory for lookup.1']
    #allocation4 [shape = 'u8[65536]{0}', space=vmem, size = 0x10000, scoped, tag = 'input window, operand 2, single buffered']
    #allocation5 [shape = 's32[1]{0}', space=sflag, size = 0x4, scoped, tag = 'scoped memory for lookup.1']
    #allocation6 [shape = 'u8[65536]{0}', space=vmem, size = 0x10000, scoped, tag = 'input window, operand 3, single buffered']
    %9 = vsyncpa [#allocation3], 0
    %10 = vsyncpa [#allocation5], 0
    loop: start=0, step=1, limit=4
    $region2: #{lookup.1} parent=1 // loop_pre_header
      _
    $region3: #{lookup.1} parent=1 // loop_header
      %s12 = sphi 0, %s16
      %p13 = scmp.ge.s32.totalorder %s12, 4
      %s22 = sphi 0, %s24
      %s25 = sphi 0, %s22
      %s26 = sphi 0, %s25
      %s42 = sphi 0, %s26
      %s46 = sphi 0, %s46
      %s48 = sphi 0, %s46
      %s49 = sphi 0, %s48
      %s63 = sphi 0, %s49
      %s67 = sphi 0, %s67
      %s69 = sphi 0, %s67
      %s70 = sphi 0, %s69
      %s84 = sphi 0, %s70
      %s88 = sphi 0, %s88
      %s90 = sphi 0, %s88
      %s91 = sphi 0, %s90
      %s105 = sphi 0, %s91
      %s111 = sphi 0, %s113
      %s114 = sphi 0, %s111
      %s115 = sphi 0, %s114
      %s131 = sphi 0, %s115
    $region4: #{lookup.1} parent=1 // loop_header_branch
      %15 = sbr.rel (%p13) target = $region8
    $region5: #{lookup.1} parent=1 // loop_body
      %s17 = ssub.s32 %s12, 1
      %s18 = ssub.s32 %s12, 2
      %s19 = sadd.s32 %s12, 1
      %s20 = ssub.s32 %s12, %s19
      %p21 = scmp.eq.s32.totalorder %s20, 0
      %s23 = sadd.s32 %s22, 1
      %s24 = scalar_select %p21, %s22, %s23
      %p27 = pneg %p21
      %p28 = scmp.eq.s32.totalorder %s12, 1
      %p29 = por %p27, %p28
      %p30 = scmp.ne.s32.totalorder %s22, %s25
      %p31 = scmp.eq.s32.totalorder %s12, 0
      %p32 = por %p30, %p31
      %p33 = scmp.ne.s32.totalorder %s22, %s25
      %p34 = scmp.eq.s32.totalorder %s17, 1
      %p35 = por %p33, %p34
      %p36 = scmp.ne.s32.totalorder %s25, %s26
      %p37 = scmp.eq.s32.totalorder %s17, 0
      %p38 = por %p36, %p37
      %p39 = scmp.ne.s32.totalorder %s25, %s26
      %p40 = scmp.eq.s32.totalorder %s18, 1
      %p41 = por %p39, %p40
      %p43 = scmp.ne.s32.totalorder %s26, %s42
      %p44 = scmp.eq.s32.totalorder %s18, 0
      %p45 = por %p43, %p44
      %s47 = sadd.s32 %s46, 1
      %p50 = scmp.eq.s32.totalorder %s12, 1
      %p51 = scmp.ne.s32.totalorder %s46, %s48
      %p52 = scmp.eq.s32.totalorder %s12, 0
      %p53 = por %p51, %p52
      %p54 = scmp.ne.s32.totalorder %s46, %s48
      %p55 = scmp.eq.s32.totalorder %s17, 1
      %p56 = por %p54, %p55
      %p57 = scmp.ne.s32.totalorder %s48, %s49
      %p58 = scmp.eq.s32.totalorder %s17, 0
      %p59 = por %p57, %p58
      %p60 = scmp.ne.s32.totalorder %s48, %s49
      %p61 = scmp.eq.s32.totalorder %s18, 1
      %p62 = por %p60, %p61
      %p64 = scmp.ne.s32.totalorder %s49, %s63
      %p65 = scmp.eq.s32.totalorder %s18, 0
      %p66 = por %p64, %p65
      %s68 = sadd.s32 %s67, 1
      %p71 = scmp.eq.s32.totalorder %s12, 1
      %p72 = scmp.ne.s32.totalorder %s67, %s69
      %p73 = scmp.eq.s32.totalorder %s12, 0
      %p74 = por %p72, %p73
      %p75 = scmp.ne.s32.totalorder %s67, %s69
      %p76 = scmp.eq.s32.totalorder %s17, 1
      %p77 = por %p75, %p76
      %p78 = scmp.ne.s32.totalorder %s69, %s70
      %p79 = scmp.eq.s32.totalorder %s17, 0
      %p80 = por %p78, %p79
      %p81 = scmp.ne.s32.totalorder %s69, %s70
      %p82 = scmp.eq.s32.totalorder %s18, 1
      %p83 = por %p81, %p82
      %p85 = scmp.ne.s32.totalorder %s70, %s84
      %p86 = scmp.eq.s32.totalorder %s18, 0
      %p87 = por %p85, %p86
      %s89 = sadd.s32 %s88, 1
      %p92 = scmp.eq.s32.totalorder %s12, 1
      %p93 = scmp.ne.s32.totalorder %s88, %s90
      %p94 = scmp.eq.s32.totalorder %s12, 0
      %p95 = por %p93, %p94
      %p96 = scmp.ne.s32.totalorder %s88, %s90
      %p97 = scmp.eq.s32.totalorder %s17, 1
      %p98 = por %p96, %p97
      %p99 = scmp.ne.s32.totalorder %s90, %s91
      %p100 = scmp.eq.s32.totalorder %s17, 0
      %p101 = por %p99, %p100
      %p102 = scmp.ne.s32.totalorder %s90, %s91
      %p103 = scmp.eq.s32.totalorder %s18, 1
      %p104 = por %p102, %p103
      %p106 = scmp.ne.s32.totalorder %s91, %s105
      %p107 = scmp.eq.s32.totalorder %s18, 0
      %p108 = por %p106, %p107
      %s109 = ssub.s32 %s12, %s19
      %p110 = scmp.eq.s32.totalorder %s109, 0
      %s112 = sadd.s32 %s111, 1
      %s113 = scalar_select %p110, %s111, %s112
      %p116 = pneg %p110
      %p117 = scmp.eq.s32.totalorder %s12, 1
      %p118 = por %p116, %p117
      %p119 = scmp.ne.s32.totalorder %s111, %s114
      %p120 = scmp.eq.s32.totalorder %s12, 0
      %p121 = por %p119, %p120
      %p122 = scmp.ne.s32.totalorder %s111, %s114
      %p123 = scmp.eq.s32.totalorder %s17, 1
      %p124 = por %p122, %p123
      %p125 = scmp.ne.s32.totalorder %s114, %s115
      %p126 = scmp.eq.s32.totalorder %s17, 0
      %p127 = por %p125, %p126
      %p128 = scmp.ne.s32.totalorder %s114, %s115
      %p129 = scmp.eq.s32.totalorder %s18, 1
      %p130 = por %p128, %p129
      %p132 = scmp.ne.s32.totalorder %s115, %s131
      %p133 = scmp.eq.s32.totalorder %s18, 0
      %p134 = por %p132, %p133
      %p135 = scmp.le.s32.totalorder 1, %s12
      %p136 = scmp.lt.s32.totalorder %s12, 3
      %p137 = pnand %p135, %p136
      %p138 = pneg %p137
      // Predicated region
      $region9: #{lookup.1} parent=5 // pred_check
        _
      $region10: #{lookup.1} parent=5 // pred_check_branch
        %140 = sbr.rel (%p137) target = $region12
      $region11: #{lookup.1} parent=5 // pred_region
        %s141 = ssub.s32 %s12, 1
        // Predicated region
        $region13: #{lookup.1} parent=11 // pred_check
          %p142 = pneg %p59
        $region14: #{lookup.1} parent=11 // pred_check_branch
          %144 = sbr.rel (%p142) target = $region16
        $region15: #{lookup.1} parent=11 // pred_region
          %s146 = ssub.s32 2048, 2048
          %147 = vsyncadd [#allocation3], %s146
          %s148 = sshll.u32 [#allocation2], 4
          %s149 = int_to_ptr.vmem [resolvable:$true] %s148
          %154 = dma.hbm_to_vmem [thread:$0]  %s1, 2048, %s149, [#allocation3], 64, 64, 4
        $region16: #{lookup.1} parent=11 // pred_fallthru
          _
        // Predicated region
        $region17: #{lookup.1} parent=11 // pred_check
          %p155 = pneg %p80
        $region18: #{lookup.1} parent=11 // pred_check_branch
          %157 = sbr.rel (%p155) target = $region20
        $region19: #{lookup.1} parent=11 // pred_region
          %s159 = ssub.s32 2048, 2048
          %160 = vsyncadd [#allocation5], %s159
          %s161 = sshll.u32 [#allocation4], 4
          %s162 = int_to_ptr.vmem [resolvable:$true] %s161
          %167 = dma.hbm_to_vmem [thread:$0]  %s2, 2048, %s162, [#allocation5], 64, 64, 4
        $region20: #{lookup.1} parent=11 // pred_fallthru
          _
        // Predicated region
        $region21: #{lookup.1} parent=11 // pred_check
          %p168 = pneg %p101
        $region22: #{lookup.1} parent=11 // pred_check_branch
          %170 = sbr.rel (%p168) target = $region24
        $region23: #{lookup.1} parent=11 // pred_region
          %s172 = ssub.s32 2048, 2048
          %173 = vsyncadd [#allocation5], %s172
          %s174 = sshll.u32 [#allocation6], 4
          %s175 = int_to_ptr.vmem [resolvable:$true] %s174
          %180 = dma.hbm_to_vmem [thread:$0]  %s3, 2048, %s175, [#allocation5], 64, 64, 4
        $region24: #{lookup.1} parent=11 // pred_fallthru
          _
      $region12: #{lookup.1} parent=5 // pred_fallthru
        _
      %p181 = scmp.lt.s32.totalorder %s12, 2
      // Predicated region
      $region25: #{lookup.1} parent=5 // pred_check
        %p182 = pneg %p181
      $region26: #{lookup.1} parent=5 // pred_check_branch
        %184 = sbr.rel (%p182) target = $region28
      $region27: #{lookup.1} parent=5 // pred_region
        // Predicated region
        $region29: #{lookup.1} parent=27 // pred_check
          %p185 = pneg %p32
        $region30: #{lookup.1} parent=27 // pred_check_branch
          %187 = sbr.rel (%p185) target = $region32
        $region31: #{lookup.1} parent=27 // pred_region
          %s188 = smul.u32 2, %s12
          %p189 = scmp.lt.s32.totalorder %s188, 3
          %s190 = scalar_select %p189, %s188, 3
          %s191 = smul.addr %s190, 8
          %s192 = scalar_lea.vmem %s0, %s191
          %s193 = smul.u32 2, %s12
        $region32: #{lookup.1} parent=27 // pred_fallthru
          _
      $region28: #{lookup.1} parent=5 // pred_fallthru
        _
      %p194 = scmp.le.s32.totalorder 1, %s12
      %p195 = scmp.lt.s32.totalorder %s12, 3
      %p196 = pnand %p194, %p195
      %p197 = pneg %p196
      // Predicated region
      $region33: #{lookup.1} parent=5 // pred_check
        _
      $region34: #{lookup.1} parent=5 // pred_check_branch
        %199 = sbr.rel (%p196) target = $region36
      $region35: #{lookup.1} parent=5 // pred_region
        %s200 = ssub.s32 %s12, 1
        // Predicated region
        $region37: #{lookup.1} parent=35 // pred_check
          %p201 = pneg %p59
        $region38: #{lookup.1} parent=35 // pred_check_branch
          %203 = sbr.rel (%p201) target = $region40
        $region39: #{lookup.1} parent=35 // pred_region
          %204 = dma.done [#allocation3], 2048
        $region40: #{lookup.1} parent=35 // pred_fallthru
          _
        // Predicated region
        $region41: #{lookup.1} parent=35 // pred_check
          %p205 = pneg %p80
        $region42: #{lookup.1} parent=35 // pred_check_branch
          %207 = sbr.rel (%p205) target = $region44
        $region43: #{lookup.1} parent=35 // pred_region
          %208 = dma.done [#allocation5], 2048
        $region44: #{lookup.1} parent=35 // pred_fallthru
          _
        // Predicated region
        $region45: #{lookup.1} parent=35 // pred_check
          %p209 = pneg %p101
        $region46: #{lookup.1} parent=35 // pred_check_branch
          %211 = sbr.rel (%p209) target = $region48
        $region47: #{lookup.1} parent=35 // pred_region
          %212 = dma.done [#allocation5], 2048
        $region48: #{lookup.1} parent=35 // pred_fallthru
          _
        %s213 = smul.u32 2, %s17
        %p214 = scmp.lt.s32.totalorder %s213, 3
        %s215 = scalar_select %p214, %s213, 3
        %s216 = smul.addr %s215, 8
        %s217 = scalar_lea.vmem %s0, %s216
        %p218 = pneg %p38
        %p219 = pneg %p35
        %p220 = pneg %p59
        %p221 = pneg %p56
        %p222 = pneg %p80
        %p223 = pneg %p77
        %p224 = pneg %p101
        %p225 = pneg %p98
        %p226 = pneg %p127
        %p227 = pneg %p124
        %s228 = smul.u32 2, %s17
        %p229 = scmp.lt.s32.totalorder %s228, 3
        %s230 = scalar_select %p229, %s228, 3
        %s231 = smul.addr %s230, 8
        %s232 = scalar_lea.vmem %s4, %s231
        %s233 = smul.u32 2, %s17
        %p234 = scmp.lt.s32.totalorder %s233, 3
        %s235 = scalar_select %p234, %s233, 3
        %s236 = smul.addr %s235, 8
        %s237 = scalar_lea.vmem %s0, %s236
        %s238 = smul.u32 2, %s17
        %s239 = smul.u32 2, %s17
        %p240 = scmp.lt.s32.totalorder %s239, 3
        %s241 = scalar_select %p240, %s239, 3
        %s242 = smul.addr %s241, 8
        %s243 = scalar_lea.vmem %s4, %s242
        %s244 = smul.u32 2, %s17
        %v246 = vld [vmem:[%s237] sm:$0xff]
        %v247 = vld [vmem:[%s237 + $0x8] sm:$0xff]
        %vm248 = vcmp.eq.s32.totalorder %v246, 0
        %vm249 = vcmp.eq.s32.totalorder %v247, 0
        %vm250 = vcmp.lt.s32.totalorder %v246, 0
        %v251 = vsub.s32 0, %v246
        %v252 = vsel %vm250, %v251, %v246
        %v253 = vmul.u32.u64.compose %v252, 2748779070
        %v254 = vextract.low.u32 %v253
        %v255 = vextract.high.u32 %v253
        %v256 = vshrl.u32 %v255, 5
        %v257 = vmul.u32 %v256, 50
        %v258 = vsub.s32 %v252, %v257
        %v259 = vsub.s32 0, %v258
        %v260 = vsel %vm250, %v259, %v258
        %vm261 = vcmp.lt.s32.totalorder %v247, 0
        %v262 = vsub.s32 0, %v247
        %v263 = vsel %vm261, %v262, %v247
        %v264 = vmul.u32.u64.compose %v263, 2748779070
        %v265 = vextract.low.u32 %v264
        %v266 = vextract.high.u32 %v264
        %v267 = vshrl.u32 %v266, 5
        %v268 = vmul.u32 %v267, 50
        %v269 = vsub.s32 %v263, %v268
        %v270 = vsub.s32 0, %v269
        %v271 = vsel %vm261, %v270, %v269
        %vm272 = vcmp.ne.s32.totalorder %v260, 0
        %vm273 = vcmp.ne.s32.totalorder %v271, 0
        %vm274 = vcmp.lt.s32.totalorder %v260, 0
        %vm275 = vcmp.lt.s32.totalorder %v271, 0
        %vm276 = vmand %vm274, %vm272
        %vm277 = vmand %vm275, %vm273
        %v278 = vadd.s32 %v260, 50
        %v279 = vadd.s32 %v271, 50
        %v280 = vsel %vm276, %v278, %v260
        %v281 = vsel %vm277, %v279, %v271
        %v282 = vadd.s32 %v280, 1
        %v283 = vadd.s32 %v281, 1
        %v284 = vsel %vm248, 0, %v282
        %v285 = vsel %vm249, 0, %v283
        %v286 = vlaneseq
        %v287 = vand.u32 %v286, 127
        %v288 = vadd.s32 %v287, 128
        %v289 = vmul.u32 %v287, 64
        %v290 = vadd.s32 %v284, %v289
        %v291 = vadd.s32 %v285, %v289
        %292 = vset.pattern.permute.xlu0 0
        %293 = vperm.xlu0 %292, %v290
        %v294 = vpop.permute.xlu0 %293
        %295 = vset.pattern.permute.xlu0 0
        %296 = vperm.xlu0 %295, %v291
        %v297 = vpop.permute.xlu0 %296
        %vm298 = vcmp.eq.s32.totalorder %v287, %v294
        %vm299 = vcmp.eq.s32.totalorder %v288, %v294
        %vm300 = vcmp.eq.s32.totalorder %v287, %v297
        %vm301 = vcmp.eq.s32.totalorder %v288, %v297
        %302 = vset.pattern.permute.xlu0 1
        %303 = vperm.xlu0 %302, %v290
        %v304 = vpop.permute.xlu0 %303
        %305 = vset.pattern.permute.xlu0 1
        %306 = vperm.xlu0 %305, %v291
        %v307 = vpop.permute.xlu0 %306
        %vm308 = vcmp.eq.s32.totalorder %v287, %v304
        %vm309 = vcmp.eq.s32.totalorder %v288, %v304
        %vm310 = vcmp.eq.s32.totalorder %v287, %v307
        %vm311 = vcmp.eq.s32.totalorder %v288, %v307
        %vm312 = vmor %vm298, %vm308
        %vm313 = vmor %vm299, %vm309
        %vm314 = vmor %vm300, %vm310
        %vm315 = vmor %vm301, %vm311
        %316 = vset.pattern.permute.xlu0 2
        %317 = vperm.xlu0 %316, %v290
        %v318 = vpop.permute.xlu0 %317
        %319 = vset.pattern.permute.xlu0 2
        %320 = vperm.xlu0 %319, %v291
        %v321 = vpop.permute.xlu0 %320
        %vm322 = vcmp.eq.s32.totalorder %v287, %v318
        %vm323 = vcmp.eq.s32.totalorder %v288, %v318
        %vm324 = vcmp.eq.s32.totalorder %v287, %v321
        %vm325 = vcmp.eq.s32.totalorder %v288, %v321
        %vm326 = vmor %vm312, %vm322
        %vm327 = vmor %vm313, %vm323
        %vm328 = vmor %vm314, %vm324
        %vm329 = vmor %vm315, %vm325
        %330 = vset.pattern.permute.xlu0 3
        %331 = vperm.xlu0 %330, %v290
        %v332 = vpop.permute.xlu0 %331
        %333 = vset.pattern.permute.xlu0 3
        %334 = vperm.xlu0 %333, %v291
        %v335 = vpop.permute.xlu0 %334
        %vm336 = vcmp.eq.s32.totalorder %v287, %v332
        %vm337 = vcmp.eq.s32.totalorder %v288, %v332
        %vm338 = vcmp.eq.s32.totalorder %v287, %v335
        %vm339 = vcmp.eq.s32.totalorder %v288, %v335
        %vm340 = vmor %vm326, %vm336
        %vm341 = vmor %vm327, %vm337
        %vm342 = vmor %vm328, %vm338
        %vm343 = vmor %vm329, %vm339
        %v344 = vsel %vm340, 1, 0
        %v345 = vsel %vm341, 1, 0
        %v346 = vsel %vm342, 1, 0
        %v347 = vsel %vm343, 1, 0
        %v348 = vcvt.s32.f32 %v344
        %v349 = vcvt.s32.f32 %v345
        %v350 = vcvt.s32.f32 %v346
        %v351 = vcvt.s32.f32 %v347
        %v352 = vpack.c.bf16 %v350, %v348
        %v353 = vpack.c.bf16 %v351, %v349
        %v354 = vld [vmem:[#allocation2] sm:$0xf]
        %v355 = vld [vmem:[#allocation2 + $0x4] sm:$0xf]
        %v356 = vld [vmem:[#allocation2 + $0x8] sm:$0xf]
        %v357 = vld [vmem:[#allocation2 + $0xc] sm:$0xf]
        %v358 = vld [vmem:[#allocation2 + $0x10] sm:$0xf]
        %v359 = vld [vmem:[#allocation2 + $0x14] sm:$0xf]
        %v360 = vld [vmem:[#allocation2 + $0x18] sm:$0xf]
        %v361 = vld [vmem:[#allocation2 + $0x1c] sm:$0xf]
        %v362 = vld [vmem:[#allocation2 + $0x20] sm:$0xf]
        %v363 = vld [vmem:[#allocation2 + $0x24] sm:$0xf]
        %v364 = vld [vmem:[#allocation2 + $0x28] sm:$0xf]
        %v365 = vld [vmem:[#allocation2 + $0x2c] sm:$0xf]
        %v366 = vld [vmem:[#allocation2 + $0x30] sm:$0xf]
        %v367 = vld [vmem:[#allocation2 + $0x34] sm:$0xf]
        %v368 = vld [vmem:[#allocation2 + $0x38] sm:$0xf]
        %v369 = vld [vmem:[#allocation2 + $0x3c] sm:$0xf]
        %v370 = vld [vmem:[#allocation2 + $0x40] sm:$0xf]
        %v371 = vld [vmem:[#allocation2 + $0x44] sm:$0xf]
        %v372 = vld [vmem:[#allocation2 + $0x48] sm:$0xf]
        %v373 = vld [vmem:[#allocation2 + $0x4c] sm:$0xf]
        %v374 = vld [vmem:[#allocation2 + $0x50] sm:$0xf]
        %v375 = vld [vmem:[#allocation2 + $0x54] sm:$0xf]
        %v376 = vld [vmem:[#allocation2 + $0x58] sm:$0xf]
        %v377 = vld [vmem:[#allocation2 + $0x5c] sm:$0xf]
        %v378 = vld [vmem:[#allocation2 + $0x60] sm:$0xf]
        %v379 = vld [vmem:[#allocation2 + $0x64] sm:$0xf]
        %v380 = vld [vmem:[#allocation2 + $0x68] sm:$0xf]
        %v381 = vld [vmem:[#allocation2 + $0x6c] sm:$0xf]
        %v382 = vld [vmem:[#allocation2 + $0x70] sm:$0xf]
        %v383 = vld [vmem:[#allocation2 + $0x74] sm:$0xf]
        %v384 = vld [vmem:[#allocation2 + $0x78] sm:$0xf]
        %v385 = vld [vmem:[#allocation2 + $0x7c] sm:$0xf]
        %v386 = vld [vmem:[#allocation4] sm:$0xf]
        %v387 = vld [vmem:[#allocation4 + $0x4] sm:$0xf]
        %v388 = vld [vmem:[#allocation4 + $0x8] sm:$0xf]
        %v389 = vld [vmem:[#allocation4 + $0xc] sm:$0xf]
        %v390 = vld [vmem:[#allocation4 + $0x10] sm:$0xf]
        %v391 = vld [vmem:[#allocation4 + $0x14] sm:$0xf]
        %v392 = vld [vmem:[#allocation4 + $0x18] sm:$0xf]
        %v393 = vld [vmem:[#allocation4 + $0x1c] sm:$0xf]
        %v394 = vld [vmem:[#allocation4 + $0x20] sm:$0xf]
        %v395 = vld [vmem:[#allocation4 + $0x24] sm:$0xf]
        %v396 = vld [vmem:[#allocation4 + $0x28] sm:$0xf]
        %v397 = vld [vmem:[#allocation4 + $0x2c] sm:$0xf]
        %v398 = vld [vmem:[#allocation4 + $0x30] sm:$0xf]
        %v399 = vld [vmem:[#allocation4 + $0x34] sm:$0xf]
        %v400 = vld [vmem:[#allocation4 + $0x38] sm:$0xf]
        %v401 = vld [vmem:[#allocation4 + $0x3c] sm:$0xf]
        %v402 = vld [vmem:[#allocation4 + $0x40] sm:$0xf]
        %v403 = vld [vmem:[#allocation4 + $0x44] sm:$0xf]
        %v404 = vld [vmem:[#allocation4 + $0x48] sm:$0xf]
        %v405 = vld [vmem:[#allocation4 + $0x4c] sm:$0xf]
        %v406 = vld [vmem:[#allocation4 + $0x50] sm:$0xf]
        %v407 = vld [vmem:[#allocation4 + $0x54] sm:$0xf]
        %v408 = vld [vmem:[#allocation4 + $0x58] sm:$0xf]
        %v409 = vld [vmem:[#allocation4 + $0x5c] sm:$0xf]
        %v410 = vld [vmem:[#allocation4 + $0x60] sm:$0xf]
        %v411 = vld [vmem:[#allocation4 + $0x64] sm:$0xf]
        %v412 = vld [vmem:[#allocation4 + $0x68] sm:$0xf]
        %v413 = vld [vmem:[#allocation4 + $0x6c] sm:$0xf]
        %v414 = vld [vmem:[#allocation4 + $0x70] sm:$0xf]
        %v415 = vld [vmem:[#allocation4 + $0x74] sm:$0xf]
        %v416 = vld [vmem:[#allocation4 + $0x78] sm:$0xf]
        %v417 = vld [vmem:[#allocation4 + $0x7c] sm:$0xf]
        %v450 = vunpack.c.l.b16 %v386
        %v451 = vunpack.c.l.b16 %v387
        %v452 = vunpack.c.l.b16 %v388
        %v453 = vunpack.c.l.b16 %v389
        %v454 = vunpack.c.l.b16 %v390
        %v455 = vunpack.c.l.b16 %v391
        %v456 = vunpack.c.l.b16 %v392
        %v457 = vunpack.c.l.b16 %v393
        %v458 = vunpack.c.l.b16 %v394
        %v459 = vunpack.c.l.b16 %v395
        %v460 = vunpack.c.l.b16 %v396
        %v461 = vunpack.c.l.b16 %v397
        %v462 = vunpack.c.l.b16 %v398
        %v463 = vunpack.c.l.b16 %v399
        %v464 = vunpack.c.l.b16 %v400
        %v465 = vunpack.c.l.b16 %v401
        %v466 = vunpack.c.l.b16 %v402
        %v467 = vunpack.c.l.b16 %v403
        %v468 = vunpack.c.l.b16 %v404
        %v469 = vunpack.c.l.b16 %v405
        %v470 = vunpack.c.l.b16 %v406
        %v471 = vunpack.c.l.b16 %v407
        %v472 = vunpack.c.l.b16 %v408
        %v473 = vunpack.c.l.b16 %v409
        %v474 = vunpack.c.l.b16 %v410
        %v475 = vunpack.c.l.b16 %v411
        %v476 = vunpack.c.l.b16 %v412
        %v477 = vunpack.c.l.b16 %v413
        %v478 = vunpack.c.l.b16 %v414
        %v479 = vunpack.c.l.b16 %v415
        %v480 = vunpack.c.l.b16 %v416
        %v481 = vunpack.c.l.b16 %v417
        %v482 = vpack.c.b16 %v451, %v450
        %v483 = vpack.c.b16 %v453, %v452
        %v484 = vpack.c.b16 %v455, %v454
        %v485 = vpack.c.b16 %v457, %v456
        %v486 = vpack.c.b16 %v459, %v458
        %v487 = vpack.c.b16 %v461, %v460
        %v488 = vpack.c.b16 %v463, %v462
        %v489 = vpack.c.b16 %v465, %v464
        %v490 = vpack.c.b16 %v467, %v466
        %v491 = vpack.c.b16 %v469, %v468
        %v492 = vpack.c.b16 %v471, %v470
        %v493 = vpack.c.b16 %v473, %v472
        %v494 = vpack.c.b16 %v475, %v474
        %v495 = vpack.c.b16 %v477, %v476
        %v496 = vpack.c.b16 %v479, %v478
        %v497 = vpack.c.b16 %v481, %v480
        %514 = vmatprep.subr.bf16.mxu0 0
        %515 = vmatpush1.bf16.msra.mxu0 %v482
        %516 = vmatprep.subr.bf16.mxu0 0
        %517 = vmatpush1.bf16.msra.mxu0 %v483
        %518 = vmatprep.subr.bf16.mxu0 0
        %519 = vmatpush1.bf16.msra.mxu0 %v484
        %520 = vmatprep.subr.bf16.mxu0 0
        %521 = vmatpush1.bf16.msra.mxu0 %v485
        %522 = vmatprep.subr.bf16.mxu0 0
        %523 = vmatpush1.bf16.msra.mxu0 %v486
        %524 = vmatprep.subr.bf16.mxu0 0
        %525 = vmatpush1.bf16.msra.mxu0 %v487
        %526 = vmatprep.subr.bf16.mxu0 0
        %527 = vmatpush1.bf16.msra.mxu0 %v488
        %528 = vmatprep.subr.bf16.mxu0 0
        %529 = vmatpush1.bf16.msra.mxu0 %v489
        %530 = vmatprep.subr.bf16.mxu0 0
        %531 = vmatpush1.bf16.msra.mxu0 %v490
        %532 = vmatprep.subr.bf16.mxu0 0
        %533 = vmatpush1.bf16.msra.mxu0 %v491
        %534 = vmatprep.subr.bf16.mxu0 0
        %535 = vmatpush1.bf16.msra.mxu0 %v492
        %536 = vmatprep.subr.bf16.mxu0 0
        %537 = vmatpush1.bf16.msra.mxu0 %v493
        %538 = vmatprep.subr.bf16.mxu0 0
        %539 = vmatpush1.bf16.msra.mxu0 %v494
        %540 = vmatprep.subr.bf16.mxu0 0
        %541 = vmatpush1.bf16.msra.mxu0 %v495
        %542 = vmatprep.subr.bf16.mxu0 0
        %543 = vmatpush1.bf16.msra.mxu0 %v496
        %544 = vmatprep.subr.bf16.mxu0 0
        %545 = vmatpush1.bf16.msra.mxu0 %v497
        %546 = vmatprep.mubr.bf16.mxu0 %v353
        %547 = vmatmul.mubr.bf16.gmra.mrb[0].mxu0 %v352
        %v548 = vpop.f32.mrb[0].mxu0
        %v549 = vadd.f32 0.0, %v548
        %v550 = vpop.f32.mrb[0].mxu0
        %v551 = vpop.f32.mrb[0].mxu0
        %v552 = vadd.f32 0.0, %v551
        %v553 = vpop.f32.mrb[0].mxu0
        %554 = vdwg.mxu0
        %v587 = vunpack.c.l.b16 %v354
        %v588 = vunpack.c.l.b16 %v355
        %v589 = vunpack.c.l.b16 %v356
        %v590 = vunpack.c.l.b16 %v357
        %v591 = vunpack.c.l.b16 %v358
        %v592 = vunpack.c.l.b16 %v359
        %v593 = vunpack.c.l.b16 %v360
        %v594 = vunpack.c.l.b16 %v361
        %v595 = vunpack.c.l.b16 %v362
        %v596 = vunpack.c.l.b16 %v363
        %v597 = vunpack.c.l.b16 %v364
        %v598 = vunpack.c.l.b16 %v365
        %v599 = vunpack.c.l.b16 %v366
        %v600 = vunpack.c.l.b16 %v367
        %v601 = vunpack.c.l.b16 %v368
        %v602 = vunpack.c.l.b16 %v369
        %v603 = vunpack.c.l.b16 %v370
        %v604 = vunpack.c.l.b16 %v371
        %v605 = vunpack.c.l.b16 %v372
        %v606 = vunpack.c.l.b16 %v373
        %v607 = vunpack.c.l.b16 %v374
        %v608 = vunpack.c.l.b16 %v375
        %v609 = vunpack.c.l.b16 %v376
        %v610 = vunpack.c.l.b16 %v377
        %v611 = vunpack.c.l.b16 %v378
        %v612 = vunpack.c.l.b16 %v379
        %v613 = vunpack.c.l.b16 %v380
        %v614 = vunpack.c.l.b16 %v381
        %v615 = vunpack.c.l.b16 %v382
        %v616 = vunpack.c.l.b16 %v383
        %v617 = vunpack.c.l.b16 %v384
        %v618 = vunpack.c.l.b16 %v385
        %v619 = vpack.c.b16 %v588, %v587
        %v620 = vpack.c.b16 %v590, %v589
        %v621 = vpack.c.b16 %v592, %v591
        %v622 = vpack.c.b16 %v594, %v593
        %v623 = vpack.c.b16 %v596, %v595
        %v624 = vpack.c.b16 %v598, %v597
        %v625 = vpack.c.b16 %v600, %v599
        %v626 = vpack.c.b16 %v602, %v601
        %v627 = vpack.c.b16 %v604, %v603
        %v628 = vpack.c.b16 %v606, %v605
        %v629 = vpack.c.b16 %v608, %v607
        %v630 = vpack.c.b16 %v610, %v609
        %v631 = vpack.c.b16 %v612, %v611
        %v632 = vpack.c.b16 %v614, %v613
        %v633 = vpack.c.b16 %v616, %v615
        %v634 = vpack.c.b16 %v618, %v617
        %651 = vmatprep.subr.bf16.mxu0 0
        %652 = vmatpush1.bf16.msra.mxu0 %v619
        %653 = vmatprep.subr.bf16.mxu0 0
        %654 = vmatpush1.bf16.msra.mxu0 %v620
        %655 = vmatprep.subr.bf16.mxu0 0
        %656 = vmatpush1.bf16.msra.mxu0 %v621
        %657 = vmatprep.subr.bf16.mxu0 0
        %658 = vmatpush1.bf16.msra.mxu0 %v622
        %659 = vmatprep.subr.bf16.mxu0 0
        %660 = vmatpush1.bf16.msra.mxu0 %v623
        %661 = vmatprep.subr.bf16.mxu0 0
        %662 = vmatpush1.bf16.msra.mxu0 %v624
        %663 = vmatprep.subr.bf16.mxu0 0
        %664 = vmatpush1.bf16.msra.mxu0 %v625
        %665 = vmatprep.subr.bf16.mxu0 0
        %666 = vmatpush1.bf16.msra.mxu0 %v626
        %667 = vmatprep.subr.bf16.mxu0 0
        %668 = vmatpush1.bf16.msra.mxu0 %v627
        %669 = vmatprep.subr.bf16.mxu0 0
        %670 = vmatpush1.bf16.msra.mxu0 %v628
        %671 = vmatprep.subr.bf16.mxu0 0
        %672 = vmatpush1.bf16.msra.mxu0 %v629
        %673 = vmatprep.subr.bf16.mxu0 0
        %674 = vmatpush1.bf16.msra.mxu0 %v630
        %675 = vmatprep.subr.bf16.mxu0 0
        %676 = vmatpush1.bf16.msra.mxu0 %v631
        %677 = vmatprep.subr.bf16.mxu0 0
        %678 = vmatpush1.bf16.msra.mxu0 %v632
        %679 = vmatprep.subr.bf16.mxu0 0
        %680 = vmatpush1.bf16.msra.mxu0 %v633
        %681 = vmatprep.subr.bf16.mxu0 0
        %682 = vmatpush1.bf16.msra.mxu0 %v634
        %683 = vmatprep.mubr.bf16.mxu0 %v353
        %684 = vmatmul.mubr.bf16.gmra.mrb[0].mxu0 %v352
        %v685 = vpop.f32.mrb[0].mxu0
        %v686 = vadd.f32 %v549, %v685
        %v687 = vpop.f32.mrb[0].mxu0
        %v688 = vpop.f32.mrb[0].mxu0
        %v689 = vadd.f32 %v552, %v688
        %v690 = vpop.f32.mrb[0].mxu0
        %691 = vdwg.mxu0
        %v692 = vld [vmem:[#allocation6] sm:$0xf]
        %v693 = vld [vmem:[#allocation6 + $0x4] sm:$0xf]
        %v694 = vld [vmem:[#allocation6 + $0x8] sm:$0xf]
        %v695 = vld [vmem:[#allocation6 + $0xc] sm:$0xf]
        %v696 = vld [vmem:[#allocation6 + $0x10] sm:$0xf]
        %v697 = vld [vmem:[#allocation6 + $0x14] sm:$0xf]
        %v698 = vld [vmem:[#allocation6 + $0x18] sm:$0xf]
        %v699 = vld [vmem:[#allocation6 + $0x1c] sm:$0xf]
        %v700 = vld [vmem:[#allocation6 + $0x20] sm:$0xf]
        %v701 = vld [vmem:[#allocation6 + $0x24] sm:$0xf]
        %v702 = vld [vmem:[#allocation6 + $0x28] sm:$0xf]
        %v703 = vld [vmem:[#allocation6 + $0x2c] sm:$0xf]
        %v704 = vld [vmem:[#allocation6 + $0x30] sm:$0xf]
        %v705 = vld [vmem:[#allocation6 + $0x34] sm:$0xf]
        %v706 = vld [vmem:[#allocation6 + $0x38] sm:$0xf]
        %v707 = vld [vmem:[#allocation6 + $0x3c] sm:$0xf]
        %v708 = vld [vmem:[#allocation6 + $0x40] sm:$0xf]
        %v709 = vld [vmem:[#allocation6 + $0x44] sm:$0xf]
        %v710 = vld [vmem:[#allocation6 + $0x48] sm:$0xf]
        %v711 = vld [vmem:[#allocation6 + $0x4c] sm:$0xf]
        %v712 = vld [vmem:[#allocation6 + $0x50] sm:$0xf]
        %v713 = vld [vmem:[#allocation6 + $0x54] sm:$0xf]
        %v714 = vld [vmem:[#allocation6 + $0x58] sm:$0xf]
        %v715 = vld [vmem:[#allocation6 + $0x5c] sm:$0xf]
        %v716 = vld [vmem:[#allocation6 + $0x60] sm:$0xf]
        %v717 = vld [vmem:[#allocation6 + $0x64] sm:$0xf]
        %v718 = vld [vmem:[#allocation6 + $0x68] sm:$0xf]
        %v719 = vld [vmem:[#allocation6 + $0x6c] sm:$0xf]
        %v720 = vld [vmem:[#allocation6 + $0x70] sm:$0xf]
        %v721 = vld [vmem:[#allocation6 + $0x74] sm:$0xf]
        %v722 = vld [vmem:[#allocation6 + $0x78] sm:$0xf]
        %v723 = vld [vmem:[#allocation6 + $0x7c] sm:$0xf]
        %v756 = vunpack.c.l.b16 %v692
        %v757 = vunpack.c.l.b16 %v693
        %v758 = vunpack.c.l.b16 %v694
        %v759 = vunpack.c.l.b16 %v695
        %v760 = vunpack.c.l.b16 %v696
        %v761 = vunpack.c.l.b16 %v697
        %v762 = vunpack.c.l.b16 %v698
        %v763 = vunpack.c.l.b16 %v699
        %v764 = vunpack.c.l.b16 %v700
        %v765 = vunpack.c.l.b16 %v701
        %v766 = vunpack.c.l.b16 %v702
        %v767 = vunpack.c.l.b16 %v703
        %v768 = vunpack.c.l.b16 %v704
        %v769 = vunpack.c.l.b16 %v705
        %v770 = vunpack.c.l.b16 %v706
        %v771 = vunpack.c.l.b16 %v707
        %v772 = vunpack.c.l.b16 %v708
        %v773 = vunpack.c.l.b16 %v709
        %v774 = vunpack.c.l.b16 %v710
        %v775 = vunpack.c.l.b16 %v711
        %v776 = vunpack.c.l.b16 %v712
        %v777 = vunpack.c.l.b16 %v713
        %v778 = vunpack.c.l.b16 %v714
        %v779 = vunpack.c.l.b16 %v715
        %v780 = vunpack.c.l.b16 %v716
        %v781 = vunpack.c.l.b16 %v717
        %v782 = vunpack.c.l.b16 %v718
        %v783 = vunpack.c.l.b16 %v719
        %v784 = vunpack.c.l.b16 %v720
        %v785 = vunpack.c.l.b16 %v721
        %v786 = vunpack.c.l.b16 %v722
        %v787 = vunpack.c.l.b16 %v723
        %v788 = vpack.c.b16 %v757, %v756
        %v789 = vpack.c.b16 %v759, %v758
        %v790 = vpack.c.b16 %v761, %v760
        %v791 = vpack.c.b16 %v763, %v762
        %v792 = vpack.c.b16 %v765, %v764
        %v793 = vpack.c.b16 %v767, %v766
        %v794 = vpack.c.b16 %v769, %v768
        %v795 = vpack.c.b16 %v771, %v770
        %v796 = vpack.c.b16 %v773, %v772
        %v797 = vpack.c.b16 %v775, %v774
        %v798 = vpack.c.b16 %v777, %v776
        %v799 = vpack.c.b16 %v779, %v778
        %v800 = vpack.c.b16 %v781, %v780
        %v801 = vpack.c.b16 %v783, %v782
        %v802 = vpack.c.b16 %v785, %v784
        %v803 = vpack.c.b16 %v787, %v786
        %820 = vmatprep.subr.bf16.mxu0 0
        %821 = vmatpush1.bf16.msra.mxu0 %v788
        %822 = vmatprep.subr.bf16.mxu0 0
        %823 = vmatpush1.bf16.msra.mxu0 %v789
        %824 = vmatprep.subr.bf16.mxu0 0
        %825 = vmatpush1.bf16.msra.mxu0 %v790
        %826 = vmatprep.subr.bf16.mxu0 0
        %827 = vmatpush1.bf16.msra.mxu0 %v791
        %828 = vmatprep.subr.bf16.mxu0 0
        %829 = vmatpush1.bf16.msra.mxu0 %v792
        %830 = vmatprep.subr.bf16.mxu0 0
        %831 = vmatpush1.bf16.msra.mxu0 %v793
        %832 = vmatprep.subr.bf16.mxu0 0
        %833 = vmatpush1.bf16.msra.mxu0 %v794
        %834 = vmatprep.subr.bf16.mxu0 0
        %835 = vmatpush1.bf16.msra.mxu0 %v795
        %836 = vmatprep.subr.bf16.mxu0 0
        %837 = vmatpush1.bf16.msra.mxu0 %v796
        %838 = vmatprep.subr.bf16.mxu0 0
        %839 = vmatpush1.bf16.msra.mxu0 %v797
        %840 = vmatprep.subr.bf16.mxu0 0
        %841 = vmatpush1.bf16.msra.mxu0 %v798
        %842 = vmatprep.subr.bf16.mxu0 0
        %843 = vmatpush1.bf16.msra.mxu0 %v799
        %844 = vmatprep.subr.bf16.mxu0 0
        %845 = vmatpush1.bf16.msra.mxu0 %v800
        %846 = vmatprep.subr.bf16.mxu0 0
        %847 = vmatpush1.bf16.msra.mxu0 %v801
        %848 = vmatprep.subr.bf16.mxu0 0
        %849 = vmatpush1.bf16.msra.mxu0 %v802
        %850 = vmatprep.subr.bf16.mxu0 0
        %851 = vmatpush1.bf16.msra.mxu0 %v803
        %852 = vmatprep.mubr.bf16.mxu0 %v353
        %853 = vmatmul.mubr.bf16.gmra.mrb[0].mxu0 %v352
        %v854 = vpop.f32.mrb[0].mxu0
        %v855 = vadd.f32 0.0, %v854
        %v856 = vpop.f32.mrb[0].mxu0
        %v857 = vpop.f32.mrb[0].mxu0
        %v858 = vadd.f32 0.0, %v857
        %v859 = vpop.f32.mrb[0].mxu0
        %860 = vdwg.mxu0
        %v861 = vadd.f32 %v686, %v855
        %v862 = vadd.f32 %v689, %v858
        %863 = vst [vmem:[%s243] sm:$0xff] %v861
        %864 = vst [vmem:[%s243 + $0x8] sm:$0xff] %v862
        %s865 = smul.u32 2, %s17
        %p866 = scmp.lt.s32.totalorder %s865, 3
        %s867 = scalar_select %p866, %s865, 3
        %s868 = smul.addr %s867, 8
        %s869 = scalar_lea.vmem %s4, %s868
        // Predicated region
        $region49: #{lookup.1} parent=35 // pred_check
          %p870 = pneg %p124
        $region50: #{lookup.1} parent=35 // pred_check_branch
          %872 = sbr.rel (%p870) target = $region52
        $region51: #{lookup.1} parent=35 // pred_region
          %s873 = smul.u32 2, %s17
        $region52: #{lookup.1} parent=35 // pred_fallthru
          _
      $region36: #{lookup.1} parent=5 // pred_fallthru
        _
      %p874 = scmp.le.s32.totalorder 2, %s12
      // Predicated region
      $region53: #{lookup.1} parent=5 // pred_check
        %p875 = pneg %p874
      $region54: #{lookup.1} parent=5 // pred_check_branch
        %877 = sbr.rel (%p875) target = $region56
      $region55: #{lookup.1} parent=5 // pred_region
        %s878 = ssub.s32 %s12, 2
        // Predicated region
        $region57: #{lookup.1} parent=55 // pred_check
          %p879 = pneg %p130
        $region58: #{lookup.1} parent=55 // pred_check_branch
          %881 = sbr.rel (%p879) target = $region60
        $region59: #{lookup.1} parent=55 // pred_region
          %s882 = smul.u32 2, %s18
          %p883 = scmp.lt.s32.totalorder %s882, 3
          %s884 = scalar_select %p883, %s882, 3
          %s885 = smul.addr %s884, 8
          %s886 = scalar_lea.vmem %s4, %s885
        $region60: #{lookup.1} parent=55 // pred_fallthru
          _
      $region56: #{lookup.1} parent=5 // pred_fallthru
        _
    $region6: #{lookup.1} parent=1 // loop_footer
      %s16 = sadd.s32 1, %s12
    $region7: #{lookup.1} parent=1 // loop_footer_branch
      %11 = sbr.rel target = $region3
    $region8: #{lookup.1} parent=1 // loop_exit
      _
    %887 = vsyncpa [#allocation3], 1
    %s888 = scalar_lea.sflag [#allocation3], 1
    %889 = vsyncpa %s888, 1
    %890 = vsyncpa [#allocation5], 1

</llo_original>
